<compile_context>
chip_gen: v7x
topology: tpu7x:2x2x1
jax: 0.10.0
libtpu: 0.0.40
codegen_flags: <defaults>
</compile_context>

<pallas_src>
import functools
import random

import jax
import jax.numpy as jnp
from jax.experimental import pallas as pl
from jax.experimental.pallas import tpu as pltpu


def _interp_matrix(out_size: int, in_size: int) -> jnp.ndarray:
    """Bilinear interpolation matrix (out_size, in_size), align_corners=False.

    Matches PyTorch's area_pixel_compute_source_index:
        src = max(0, (dst + 0.5) * (in/out) - 0.5)
    """
    scale = in_size / out_size
    dst = jnp.arange(out_size, dtype=jnp.float32)
    src = jnp.maximum((dst + 0.5) * scale - 0.5, 0.0)
    i0 = jnp.clip(jnp.floor(src).astype(jnp.int32), 0, in_size - 1)
    i1 = jnp.minimum(i0 + 1, in_size - 1)
    w1 = src - i0.astype(jnp.float32)
    w0 = 1.0 - w1
    rows = jnp.arange(out_size)
    m = jnp.zeros((out_size, in_size), jnp.float32)
    m = m.at[rows, i0].add(w0)
    m = m.at[rows, i1].add(w1)
    return m


def _resize_kernel(x_ref, r_ref, c_ref, o_ref, *scratch, row_first, fuse_cols):
    """Resize a block of B planes: o[p] = R @ x[p] @ C (exact out_w, no pad)."""
    r = r_ref[...]                      # (Ho, Hi)  bf16
    c = c_ref[...]                      # (Wi, Wo)  bf16
    b, hi, wi = x_ref.shape

    if fuse_cols:
        # Columns first, fused across planes: one big MXU matmul with M = B*Hi.
        # The bf16 cast of x happens here (free VPU filler under the MXU),
        # not as a separate HBM pass in the wrapper.
        t_ref, = scratch                # (B*Hi, Wo) f32 VMEM scratch
        xr = x_ref[...].reshape(b * hi, wi).astype(jnp.bfloat16)
        t_ref[...] = jnp.dot(xr, c, preferred_element_type=jnp.float32)
        for p in range(b):              # row pass, one plane at a time
            tp = t_ref[pl.ds(p * hi, hi), :].astype(jnp.bfloat16)
            y = jnp.dot(r, tp, preferred_element_type=jnp.float32)
            o_ref[p] = y.astype(o_ref.dtype)
    elif row_first:
        # Rows first (only when it saves >~30% FLOPs, i.e. strong downscales).
        for p in range(b):
            xp = x_ref[p].astype(jnp.bfloat16)
            t = jnp.dot(r, xp, preferred_element_type=jnp.float32).astype(jnp.bfloat16)
            y = jnp.dot(t, c, preferred_element_type=jnp.float32)
            o_ref[p] = y.astype(o_ref.dtype)
    else:
        # Columns first, per plane (input H not sublane-aligned for its dtype,
        # so the (B,Hi)->(B*Hi) collapse would force a relayout copy).
        for p in range(b):
            xp = x_ref[p].astype(jnp.bfloat16)
            t = jnp.dot(xp, c, preferred_element_type=jnp.float32).astype(jnp.bfloat16)
            y = jnp.dot(r, t, preferred_element_type=jnp.float32)
            o_ref[p] = y.astype(o_ref.dtype)


def _vmem_estimate(b, hi, wi, ho, wo, in_bytes, out_bytes, fused):
    """Tight-ish VMEM bytes estimate for a B-plane block."""
    weights = 2 * (ho * hi + wi * wo)                                 # bf16, Buffered(1)
    io = 2 * b * hi * wi * in_bytes + 2 * b * ho * wo * out_bytes     # double-buffered blocks
    if fused:
        scratch = 4 * b * hi * wo                                     # f32 column-pass scratch
        live = 2 * b * hi * wi + 4 * ho * wo                          # bf16 xr + one f32 plane
    else:
        scratch = 0
        live = 4 * max(hi * wo, ho * wi) + 4 * ho * wo                # one plane's temporaries
    return weights + io + scratch + live


def _vmem_budget_and_cap():
    """(block-selection budget, vmem_limit cap, prefer_even_steps) per generation."""
    vmem = 64 << 20                       # conservative default (v7x-sized)
    try:
        info = pltpu.get_tpu_info()
        for attr in ("vmem_capacity_bytes", "vmem_bytes"):
            v = getattr(info, attr, None)
            if v:
                vmem = int(v)
                break
    except Exception:
        pass
    if vmem >= (96 << 20):                # v5e / v6e: 128 MiB VMEM
        return 80 << 20, 100 << 20, False
    # v7x: 64 MiB per TensorCore -> leave headroom, load-balance the 2 cores.
    return 32 << 20, 48 << 20, True


def _choose_plane_block(planes, hi, wi, ho, wo, in_bytes, out_bytes, fused,
                        budget, prefer_even_steps, max_b=32):
    """Largest divisor of `planes` fitting the budget with good grid-step count."""
    fitting = [b for b in range(1, min(planes, max_b) + 1)
               if planes % b == 0
               and _vmem_estimate(b, hi, wi, ho, wo, in_bytes, out_bytes,
                                  fused) <= budget]
    if not fitting:
        return 1
    if prefer_even_steps:                 # v7x: even and >= 4 steps, then relax
        tiers = [(True, 4), (False, 2), (False, 1)]
    else:
        tiers = [(False, 2), (False, 1)]
    for need_even, min_steps in tiers:
        cand = [b for b in fitting
                if (planes // b) >= min_steps
                and (not need_even or (planes // b) % 2 == 0)]
        if cand:
            return max(cand)
    return max(fitting)


def bilinear_upsample(x: jnp.ndarray, out_h: int, out_w: int) -> jnp.ndarray:
    """Bilinear resize of an NCHW tensor to (out_h, out_w) via a Pallas kernel."""
    n, c, h_in, w_in = x.shape

    # Identity size -> PyTorch bilinear is exact identity; skip the kernel.
    if out_h == h_in and out_w == w_in:
        return x

    r_mat = _interp_matrix(out_h, h_in).astype(jnp.bfloat16)    # (Ho, Hi)
    c_mat = _interp_matrix(out_w, w_in).T.astype(jnp.bfloat16)  # (Wi, Wo), exact width

    planes = n * c
    x_flat = x.reshape(planes, h_in, w_in)       # metadata-only; keeps x.dtype

    in_bytes = jnp.dtype(x.dtype).itemsize
    out_bytes = in_bytes

    # Fuse gate: collapsing (B, Hi) into sublanes is free only when Hi is a
    # multiple of the input dtype's sublane packing (8 for f32, 16 for bf16).
    pack = max(1, 32 // in_bytes)
    can_fuse = (h_in % pack == 0) or planes == 1

    # Static matmul-order choice (per-plane MACs); bias toward the fused
    # column-first path unless rows-first saves >30% FLOPs.
    flops_row_first = out_h * h_in * w_in + out_h * w_in * out_w
    flops_col_first = h_in * w_in * out_w + out_h * h_in * out_w
    if can_fuse:
        row_first = flops_row_first < 0.7 * flops_col_first
    else:
        row_first = flops_row_first < flops_col_first
    fuse_cols = can_fuse and not row_first

    budget, cap, prefer_even = _vmem_budget_and_cap()
    bp = _choose_plane_block(planes, h_in, w_in, out_h, out_w,
                             in_bytes, out_bytes, fuse_cols,
                             budget, prefer_even)
    est = _vmem_estimate(bp, h_in, w_in, out_h, out_w, in_bytes, out_bytes,
                         fuse_cols)
    if est > cap:
        # TODO(synk): tile H_out on a second grid axis instead of failing here.
        raise NotImplementedError(
            "bilinear_upsample: a single-plane block (%d bytes est.) exceeds "
            "the per-core VMEM cap (%d bytes); H_out tiling not implemented."
            % (est, cap))
    vmem_limit = int(min(cap, max(32 << 20, 2 * est)))

    kernel = functools.partial(_resize_kernel,
                               row_first=row_first, fuse_cols=fuse_cols)
    scratch_shapes = ([pltpu.VMEM((bp * h_in, out_w), jnp.float32)]
                      if fuse_cols else [])

    out_flat = pl.pallas_call(
        kernel,
        out_shape=jax.ShapeDtypeStruct((planes, out_h, out_w), x.dtype),
        grid=(planes // bp,),
        in_specs=[
            pl.BlockSpec((bp, h_in, w_in), lambda i: (i, 0, 0)),
            pl.BlockSpec((out_h, h_in), lambda i: (0, 0),
                         pipeline_mode=pl.Buffered(1)),
            pl.BlockSpec((w_in, out_w), lambda i: (0, 0),
                         pipeline_mode=pl.Buffered(1)),
        ],
        out_specs=pl.BlockSpec((bp, out_h, out_w), lambda i: (i, 0, 0)),
        scratch_shapes=scratch_shapes,
        compiler_params=pltpu.CompilerParams(
            dimension_semantics=("parallel",),
            vmem_limit_bytes=vmem_limit),
    )(x_flat, r_mat, c_mat)

    return out_flat.reshape(n, c, out_h, out_w)   # metadata-only reshape


def _reference_resize(x: jnp.ndarray, out_h: int, out_w: int) -> jnp.ndarray:
    """Plain-JAX f32 reference of the same separable bilinear resize."""
    n, c, h, w = x.shape
    r = _interp_matrix(out_h, h)
    cm = _interp_matrix(out_w, w).T
    return jnp.einsum('oh,nchw,wv->ncov', r, x.astype(jnp.float32), cm
                      ).astype(x.dtype)


class RandomScale:
    """JAX/Pallas port of segmentation.model.RandomScale."""

    def __init__(self, scales=(0.7, 0.8, 0.9, 1, 1.1, 1.2, 1.3),
                 upsampling_mode="bilinear"):
        assert upsampling_mode == "bilinear"
        self.scales = list(scales)
        self.upsampling_mode = upsampling_mode
        self.training = False

    def __call__(self, x: jnp.ndarray) -> jnp.ndarray:
        n, c, h, w = x.shape
        if self.training:
            # Host-side RNG, mirroring the PyTorch module.  NOTE: each distinct
            # (out_h, out_w) pair compiles its own kernel (cached thereafter).
            scale = random.choice(self.scales)
            out_h, out_w = int(scale * h), int(scale * w)
        else:
            out_h, out_w = h, w
        return bilinear_upsample(x, out_h, out_w)

    def __repr__(self):
        return "RandomScale(mode={mode}, scales={scales})".format(
            mode=self.upsampling_mode, scales=self.scales)


if __name__ == "__main__":
    key = jax.random.PRNGKey(0)
    x = jax.random.normal(key, (2, 4, 16, 16), dtype=jnp.float32)

    # Exercise the kernel paths directly against a plain-JAX reference
    # (bf16 MXU tolerance).
    test_cases = [
        (x, 11, 11),   # downscale         -> fused column-first path
        (x, 20, 20),   # upscale, tiny W   -> fused column-first path
    ]
    x2 = jax.random.normal(jax.random.PRNGKey(1), (1, 2, 32, 256), jnp.float32)
    test_cases.append((x2, 40, 320))   # fused column-first, larger M
    x3 = jax.random.normal(jax.random.PRNGKey(2), (1, 2, 20, 256), jnp.float32)
    test_cases.append((x3, 30, 320))   # non-fused fallback (Hi % 8 != 0)

    for xt, oh, ow in test_cases:
        y = jax.block_until_ready(bilinear_upsample(xt, oh, ow))
        y_ref = _reference_resize(xt, oh, ow)
        assert y.shape == (xt.shape[0], xt.shape[1], oh, ow), y.shape
        assert jnp.allclose(y, y_ref, atol=5e-2, rtol=5e-2), (oh, ow)

    mod = RandomScale()

    # Eval mode: output size == input size -> exact identity (short-circuited).
    mod.training = False
    y_eval = jax.block_until_ready(mod(x))
    assert y_eval.shape == x.shape
    assert jnp.allclose(y_eval, x, atol=1e-6), "eval-mode identity resize failed"

    # Training mode: deterministic 'random' scale via seeded python RNG.
    random.seed(0)
    mod.training = True
    y_train = jax.block_until_ready(mod(x))
    valid_sizes = [int(s * 16) for s in mod.scales]
    assert y_train.shape[0] == 2 and y_train.shape[1] == 4
    assert y_train.shape[2] in valid_sizes and y_train.shape[3] in valid_sizes

    print("KERNEL_OK")
</pallas_src>

<mosaic_0001>
module attributes {stable_mosaic.version = 11 : i64} {
  func.func @_resize_kernel(%arg0: i32, %arg1: memref<2x16x16xf32, #tpu.memory_space<vmem>>, %arg2: memref<11x16xbf16, #tpu.memory_space<vmem>>, %arg3: memref<16x11xbf16, #tpu.memory_space<vmem>>, %arg4: memref<2x11x11xf32, #tpu.memory_space<vmem>>, %arg5: memref<32x11xf32, #tpu.memory_space<vmem>>) attributes {dimension_semantics = [#tpu.dimension_semantics<parallel>], iteration_bounds = array<i64: 4>, scalar_prefetch = 0 : i64, scratch_operands = 1 : i64, tpu.core_type = #tpu.core_type<tc>, window_params = [{transform_indices = @transform_0, window_bounds = array<i64: 2, 16, 16>}, {pipeline_mode = #tpu.pipeline_mode<synchronous>, transform_indices = @transform_1, window_bounds = array<i64: 11, 16>}, {pipeline_mode = #tpu.pipeline_mode<synchronous>, transform_indices = @transform_2, window_bounds = array<i64: 16, 11>}, {transform_indices = @transform_3, window_bounds = array<i64: 2, 11, 11>}]} {
    %c0 = arith.constant 0 : index
    %c0_0 = arith.constant 0 : index
    %0 = vector.load %arg2[%c0, %c0_0] : memref<11x16xbf16, #tpu.memory_space<vmem>>, vector<11x16xbf16>
    %c0_1 = arith.constant 0 : index
    %c0_2 = arith.constant 0 : index
    %1 = vector.load %arg3[%c0_1, %c0_2] : memref<16x11xbf16, #tpu.memory_space<vmem>>, vector<16x11xbf16>
    %c0_3 = arith.constant 0 : index
    %c0_4 = arith.constant 0 : index
    %c0_5 = arith.constant 0 : index
    %2 = vector.load %arg1[%c0_3, %c0_4, %c0_5] : memref<2x16x16xf32, #tpu.memory_space<vmem>>, vector<2x16x16xf32>
    %3 = vector.shape_cast %2 : vector<2x16x16xf32> to vector<32x16xf32>
    %4 = arith.truncf %3 : vector<32x16xf32> to vector<32x16xbf16>
    %cst = arith.constant dense<0.000000e+00> : vector<32x11xf32>
    %5 = tpu.matmul %4, %1, %cst {dimension_numbers = #tpu.dot_dimension_numbers<[1], [0], [0], [1], [0, 0, 1, 1], [], []>} : vector<32x16xbf16>, vector<16x11xbf16>, vector<32x11xf32> -> vector<32x11xf32>
    %c0_6 = arith.constant 0 : index
    %c0_7 = arith.constant 0 : index
    %6 = vector.load %arg5[%c0_6, %c0_7] : memref<32x11xf32, #tpu.memory_space<vmem>>, vector<32x11xf32>
    tpu.vector_store %arg5[%c0_6, %c0_7], %5 {strides = array<i32>} : memref<32x11xf32, #tpu.memory_space<vmem>>, vector<32x11xf32>,
    %c0_8 = arith.constant 0 : index
    %c0_9 = arith.constant 0 : index
    %7 = vector.load %arg5[%c0_8, %c0_9] : memref<32x11xf32, #tpu.memory_space<vmem>>, vector<16x11xf32>
    %8 = arith.truncf %7 : vector<16x11xf32> to vector<16x11xbf16>
    %cst_10 = arith.constant dense<0.000000e+00> : vector<11x11xf32>
    %9 = tpu.matmul %0, %8, %cst_10 {dimension_numbers = #tpu.dot_dimension_numbers<[1], [0], [0], [1], [0, 0, 1, 1], [], []>} : vector<11x16xbf16>, vector<16x11xbf16>, vector<11x11xf32> -> vector<11x11xf32>
    %c0_11 = arith.constant 0 : index
    %c0_12 = arith.constant 0 : index
    %c0_13 = arith.constant 0 : index
    %10 = vector.load %arg4[%c0_11, %c0_12, %c0_13] : memref<2x11x11xf32, #tpu.memory_space<vmem>>, vector<1x11x11xf32>
    %11 = vector.shape_cast %10 : vector<1x11x11xf32> to vector<11x11xf32>
    %12 = vector.shape_cast %9 : vector<11x11xf32> to vector<1x11x11xf32>
    tpu.vector_store %arg4[%c0_11, %c0_12, %c0_13], %12 {strides = array<i32>} : memref<2x11x11xf32, #tpu.memory_space<vmem>>, vector<1x11x11xf32>,
    %c16 = arith.constant 16 : index
    %c0_14 = arith.constant 0 : index
    %13 = vector.load %arg5[%c16, %c0_14] : memref<32x11xf32, #tpu.memory_space<vmem>>, vector<16x11xf32>
    %14 = arith.truncf %13 : vector<16x11xf32> to vector<16x11xbf16>
    %cst_15 = arith.constant dense<0.000000e+00> : vector<11x11xf32>
    %15 = tpu.matmul %0, %14, %cst_15 {dimension_numbers = #tpu.dot_dimension_numbers<[1], [0], [0], [1], [0, 0, 1, 1], [], []>} : vector<11x16xbf16>, vector<16x11xbf16>, vector<11x11xf32> -> vector<11x11xf32>
    %c1 = arith.constant 1 : index
    %c0_16 = arith.constant 0 : index
    %c0_17 = arith.constant 0 : index
    %16 = vector.load %arg4[%c1, %c0_16, %c0_17] : memref<2x11x11xf32, #tpu.memory_space<vmem>>, vector<1x11x11xf32>
    %17 = vector.shape_cast %16 : vector<1x11x11xf32> to vector<11x11xf32>
    %18 = vector.shape_cast %15 : vector<11x11xf32> to vector<1x11x11xf32>
    tpu.vector_store %arg4[%c1, %c0_16, %c0_17], %18 {strides = array<i32>} : memref<2x11x11xf32, #tpu.memory_space<vmem>>, vector<1x11x11xf32>,
    return
  }
  func.func @transform_0(%arg0: i32) -> (i32, i32, i32) {
    %c0_i32 = arith.constant 0 : i32
    %c0_i32_0 = arith.constant 0 : i32
    %c0_i32_1 = arith.constant 0 : i32
    return %arg0, %c0_i32, %c0_i32_0 : i32, i32, i32
  }
  func.func @transform_1(%arg0: i32) -> (i32, i32) {
    %c0_i32 = arith.constant 0 : i32
    %c0_i32_0 = arith.constant 0 : i32
    %c0_i32_1 = arith.constant 0 : i32
    return %c0_i32, %c0_i32_0 : i32, i32
  }
  func.func @transform_2(%arg0: i32) -> (i32, i32) {
    %c0_i32 = arith.constant 0 : i32
    %c0_i32_0 = arith.constant 0 : i32
    %c0_i32_1 = arith.constant 0 : i32
    return %c0_i32, %c0_i32_0 : i32, i32
  }
  func.func @transform_3(%arg0: i32) -> (i32, i32, i32) {
    %c0_i32 = arith.constant 0 : i32
    %c0_i32_0 = arith.constant 0 : i32
    %c0_i32_1 = arith.constant 0 : i32
    return %arg0, %c0_i32, %c0_i32_0 : i32, i32, i32
  }
}

</mosaic_0001>

<llo_original>
// kernel: tpu_custom_call.1
$region0: #{tpu_custom_call.1}
  #allocation0 [shape = 'u32[]', space=smem, size = 0x4, offset = 0x4, fixed_abs, tag = 'smem constant byte address 0x4 - core index']
  #allocation1 [shape = 'u32[144,128]{1,0:T(1,128)}', space=vmem, size = 0x12000, scoped, tag = 'internal scratch']
  #allocation2 [shape = 'f32[32,11]{1,0:T(8,128)}', space=vmem, size = 0x4000, scoped, tag = 'scratch operand']
  %s0 = inlined_call_operand.hbm [shape: f32[8,16,16], index: 0, kind: input, shape index: {}]
  %s1 = inlined_call_operand.hbm [shape: bf16[11,16], index: 1, kind: input, shape index: {}]
  %s2 = inlined_call_operand.hbm [shape: bf16[16,11], index: 2, kind: input, shape index: {}]
  %s3 = inlined_call_operand.vmem [shape: f32[8,11,11], index: 3, kind: output, shape index: {}]
  %s4 = sld [smem:[#allocation0]]
  $region57: #{tpu_custom_call.1} parent=0
    _
  %s6 = ssub.s32 1, %s4
  %s7 = scalar_select 0, %s6, %s4
  $region1: #{tpu_custom_call.1} parent=0
    #allocation3 [shape = 'u8[32768]{0}', space=vmem, size = 0x8000, scoped, tag = 'input window, operand 0']
    #allocation4 [shape = 's32[2]{0}', space=sflag, size = 0x8, scoped, tag = 'scoped memory for tpu_custom_call.1']
    #allocation5 [shape = 'u8[4096]{0}', space=vmem, size = 0x1000, scoped, tag = 'input window, operand 1, single buffered']
    #allocation6 [shape = 's32[1]{0}', space=sflag, size = 0x4, scoped, tag = 'scoped memory for tpu_custom_call.1']
    #allocation7 [shape = 'u8[4096]{0}', space=vmem, size = 0x1000, scoped, tag = 'input window, operand 2, single buffered']
    %8 = vsyncpa [#allocation4], 0
    %s9 = scalar_lea.sflag [#allocation4], 1
    %10 = vsyncpa %s9, 0
    %11 = vsyncpa [#allocation6], 0
    loop: start=0, step=1, limit=6
    $region2: #{tpu_custom_call.1} parent=1 // loop_pre_header
      _
    $region3: #{tpu_custom_call.1} parent=1 // loop_header
      %s13 = sphi 0, %s17
      %p14 = scmp.ge.s32.totalorder %s13, 6
      %s23 = sphi 0, %s25
      %s26 = sphi 0, %s23
      %s27 = sphi 0, %s26
      %s43 = sphi 0, %s27
      %s47 = sphi 0, %s47
      %s49 = sphi 0, %s47
      %s50 = sphi 0, %s49
      %s64 = sphi 0, %s50
      %s68 = sphi 0, %s68
      %s70 = sphi 0, %s68
      %s71 = sphi 0, %s70
      %s85 = sphi 0, %s71
      %s91 = sphi 0, %s93
      %s94 = sphi 0, %s91
      %s95 = sphi 0, %s94
      %s111 = sphi 0, %s95
    $region4: #{tpu_custom_call.1} parent=1 // loop_header_branch
      %16 = sbr.rel (%p14) target = $region8
    $region5: #{tpu_custom_call.1} parent=1 // loop_body
      %s18 = ssub.s32 %s13, 1
      %s19 = ssub.s32 %s13, 2
      %s20 = sadd.s32 %s13, 1
      %s21 = ssub.s32 %s13, %s20
      %p22 = scmp.eq.s32.totalorder %s21, 0
      %s24 = sadd.s32 %s23, 1
      %s25 = scalar_select %p22, %s23, %s24
      %p28 = pneg %p22
      %p29 = scmp.eq.s32.totalorder %s13, 3
      %p30 = por %p28, %p29
      %p31 = scmp.ne.s32.totalorder %s23, %s26
      %p32 = scmp.eq.s32.totalorder %s13, 0
      %p33 = por %p31, %p32
      %p34 = scmp.ne.s32.totalorder %s23, %s26
      %p35 = scmp.eq.s32.totalorder %s18, 3
      %p36 = por %p34, %p35
      %p37 = scmp.ne.s32.totalorder %s26, %s27
      %p38 = scmp.eq.s32.totalorder %s18, 0
      %p39 = por %p37, %p38
      %p40 = scmp.ne.s32.totalorder %s26, %s27
      %p41 = scmp.eq.s32.totalorder %s19, 3
      %p42 = por %p40, %p41
      %p44 = scmp.ne.s32.totalorder %s27, %s43
      %p45 = scmp.eq.s32.totalorder %s19, 0
      %p46 = por %p44, %p45
      %s48 = sadd.s32 %s47, 1
      %p51 = scmp.eq.s32.totalorder %s13, 3
      %p52 = scmp.ne.s32.totalorder %s47, %s49
      %p53 = scmp.eq.s32.totalorder %s13, 0
      %p54 = por %p52, %p53
      %p55 = scmp.ne.s32.totalorder %s47, %s49
      %p56 = scmp.eq.s32.totalorder %s18, 3
      %p57 = por %p55, %p56
      %p58 = scmp.ne.s32.totalorder %s49, %s50
      %p59 = scmp.eq.s32.totalorder %s18, 0
      %p60 = por %p58, %p59
      %p61 = scmp.ne.s32.totalorder %s49, %s50
      %p62 = scmp.eq.s32.totalorder %s19, 3
      %p63 = por %p61, %p62
      %p65 = scmp.ne.s32.totalorder %s50, %s64
      %p66 = scmp.eq.s32.totalorder %s19, 0
      %p67 = por %p65, %p66
      %s69 = sadd.s32 %s68, 1
      %p72 = scmp.eq.s32.totalorder %s13, 3
      %p73 = scmp.ne.s32.totalorder %s68, %s70
      %p74 = scmp.eq.s32.totalorder %s13, 0
      %p75 = por %p73, %p74
      %p76 = scmp.ne.s32.totalorder %s68, %s70
      %p77 = scmp.eq.s32.totalorder %s18, 3
      %p78 = por %p76, %p77
      %p79 = scmp.ne.s32.totalorder %s70, %s71
      %p80 = scmp.eq.s32.totalorder %s18, 0
      %p81 = por %p79, %p80
      %p82 = scmp.ne.s32.totalorder %s70, %s71
      %p83 = scmp.eq.s32.totalorder %s19, 3
      %p84 = por %p82, %p83
      %p86 = scmp.ne.s32.totalorder %s71, %s85
      %p87 = scmp.eq.s32.totalorder %s19, 0
      %p88 = por %p86, %p87
      %s89 = ssub.s32 %s13, %s20
      %p90 = scmp.eq.s32.totalorder %s89, 0
      %s92 = sadd.s32 %s91, 1
      %s93 = scalar_select %p90, %s91, %s92
      %p96 = pneg %p90
      %p97 = scmp.eq.s32.totalorder %s13, 3
      %p98 = por %p96, %p97
      %p99 = scmp.ne.s32.totalorder %s91, %s94
      %p100 = scmp.eq.s32.totalorder %s13, 0
      %p101 = por %p99, %p100
      %p102 = scmp.ne.s32.totalorder %s91, %s94
      %p103 = scmp.eq.s32.totalorder %s18, 3
      %p104 = por %p102, %p103
      %p105 = scmp.ne.s32.totalorder %s94, %s95
      %p106 = scmp.eq.s32.totalorder %s18, 0
      %p107 = por %p105, %p106
      %p108 = scmp.ne.s32.totalorder %s94, %s95
      %p109 = scmp.eq.s32.totalorder %s19, 3
      %p110 = por %p108, %p109
      %p112 = scmp.ne.s32.totalorder %s95, %s111
      %p113 = scmp.eq.s32.totalorder %s19, 0
      %p114 = por %p112, %p113
      %p115 = scmp.le.s32.totalorder 1, %s13
      %p116 = scmp.lt.s32.totalorder %s13, 5
      %p117 = pnand %p115, %p116
      %p118 = pneg %p117
      // Predicated region
      $region9: #{tpu_custom_call.1} parent=5 // pred_check
        _
      $region10: #{tpu_custom_call.1} parent=5 // pred_check_branch
        %120 = sbr.rel (%p117) target = $region12
      $region11: #{tpu_custom_call.1} parent=5 // pred_region
        %s121 = ssub.s32 %s13, 1
        // Predicated region
        $region13: #{tpu_custom_call.1} parent=11 // pred_check
          %p122 = pneg %p60
        $region14: #{tpu_custom_call.1} parent=11 // pred_check_branch
          %124 = sbr.rel (%p122) target = $region16
        $region15: #{tpu_custom_call.1} parent=11 // pred_region
          %s126 = ssub.s32 128, 128
          %127 = vsyncadd [#allocation6], %s126
          %s128 = sshll.u32 [#allocation5], 4
          %s129 = int_to_ptr.vmem [resolvable:$true] %s128
          %134 = dma.hbm_to_vmem [thread:$0]  %s1, 128, %s129, [#allocation6], 64, 64, 4
        $region16: #{tpu_custom_call.1} parent=11 // pred_fallthru
          _
        // Predicated region
        $region17: #{tpu_custom_call.1} parent=11 // pred_check
          %p135 = pneg %p81
        $region18: #{tpu_custom_call.1} parent=11 // pred_check_branch
          %137 = sbr.rel (%p135) target = $region20
        $region19: #{tpu_custom_call.1} parent=11 // pred_region
          %s139 = ssub.s32 128, 128
          %140 = vsyncadd [#allocation6], %s139
          %s141 = sshll.u32 [#allocation7], 4
          %s142 = int_to_ptr.vmem [resolvable:$true] %s141
          %147 = dma.hbm_to_vmem [thread:$0]  %s2, 128, %s142, [#allocation6], 64, 64, 4
        $region20: #{tpu_custom_call.1} parent=11 // pred_fallthru
          _
      $region12: #{tpu_custom_call.1} parent=5 // pred_fallthru
        _
      %p148 = scmp.lt.s32.totalorder %s13, 4
      // Predicated region
      $region21: #{tpu_custom_call.1} parent=5 // pred_check
        %p149 = pneg %p148
      $region22: #{tpu_custom_call.1} parent=5 // pred_check_branch
        %151 = sbr.rel (%p149) target = $region24
      $region23: #{tpu_custom_call.1} parent=5 // pred_region
        // Predicated region
        $region25: #{tpu_custom_call.1} parent=23 // pred_check
          %p152 = pneg %p33
        $region26: #{tpu_custom_call.1} parent=23 // pred_check_branch
          %154 = sbr.rel (%p152) target = $region28
        $region27: #{tpu_custom_call.1} parent=23 // pred_region
          %s155 = sand.u32 %s23, 1
          %s156 = scalar_lea.sflag [#allocation4], %s155
          %s157 = sand.u32 %s23, 1
          %s158 = smul.addr %s157, 32
          %s159 = scalar_lea.vmem [#allocation3], %s158
          %s160 = smul.u32 2, %s13
          %s162 = ssub.s32 512, 512
          %163 = vsyncadd %s156, %s162
          %s164 = smul.addr %s160, 2
          %s165 = smul.addr %s164, 128
          %s166 = scalar_lea.hbm %s0, %s165
          %s167 = sshll.u32 %s159, 4
          %s168 = int_to_ptr.vmem [resolvable:$true] %s167
          %173 = dma.hbm_to_vmem [thread:$0]  %s166, 512, %s168, %s156, 128, 128, 8
        $region28: #{tpu_custom_call.1} parent=23 // pred_fallthru
          _
      $region24: #{tpu_custom_call.1} parent=5 // pred_fallthru
        _
      %p174 = scmp.le.s32.totalorder 1, %s13
      %p175 = scmp.lt.s32.totalorder %s13, 5
      %p176 = pnand %p174, %p175
      %p177 = pneg %p176
      // Predicated region
      $region29: #{tpu_custom_call.1} parent=5 // pred_check
        _
      $region30: #{tpu_custom_call.1} parent=5 // pred_check_branch
        %179 = sbr.rel (%p176) target = $region32
      $region31: #{tpu_custom_call.1} parent=5 // pred_region
        %s180 = ssub.s32 %s13, 1
        %s181 = sand.u32 %s26, 1
        %s182 = scalar_lea.sflag [#allocation4], %s181
        %s183 = sand.u32 %s26, 1
        %s184 = smul.addr %s183, 32
        %s185 = scalar_lea.vmem [#allocation3], %s184
        // Predicated region
        $region33: #{tpu_custom_call.1} parent=31 // pred_check
          %p186 = pneg %p39
        $region34: #{tpu_custom_call.1} parent=31 // pred_check_branch
          %188 = sbr.rel (%p186) target = $region36
        $region35: #{tpu_custom_call.1} parent=31 // pred_region
          %189 = dma.done %s182, 512
        $region36: #{tpu_custom_call.1} parent=31 // pred_fallthru
          _
        // Predicated region
        $region37: #{tpu_custom_call.1} parent=31 // pred_check
          %p190 = pneg %p60
        $region38: #{tpu_custom_call.1} parent=31 // pred_check_branch
          %192 = sbr.rel (%p190) target = $region40
        $region39: #{tpu_custom_call.1} parent=31 // pred_region
          %193 = dma.done [#allocation6], 128
        $region40: #{tpu_custom_call.1} parent=31 // pred_fallthru
          _
        // Predicated region
        $region41: #{tpu_custom_call.1} parent=31 // pred_check
          %p194 = pneg %p81
        $region42: #{tpu_custom_call.1} parent=31 // pred_check_branch
          %196 = sbr.rel (%p194) target = $region44
        $region43: #{tpu_custom_call.1} parent=31 // pred_region
          %197 = dma.done [#allocation6], 128
        $region44: #{tpu_custom_call.1} parent=31 // pred_fallthru
          _
        %s198 = sand.u32 %s26, 1
        %s199 = scalar_lea.sflag [#allocation4], %s198
        %s200 = sand.u32 %s26, 1
        %s201 = smul.addr %s200, 32
        %s202 = scalar_lea.vmem [#allocation3], %s201
        %p203 = pneg %p39
        %p204 = pneg %p36
        %p205 = pneg %p60
        %p206 = pneg %p57
        %p207 = pneg %p81
        %p208 = pneg %p78
        %p209 = pneg %p107
        %p210 = pneg %p104
        %s211 = smul.u32 2, %s18
        %p212 = scmp.lt.s32.totalorder %s211, 7
        %s213 = scalar_select %p212, %s211, 7
        %s214 = smul.addr %s213, 2
        %s215 = smul.addr %s214, 8
        %s216 = scalar_lea.vmem %s3, %s215
        %s217 = smul.u32 2, %s18
        %s218 = smul.u32 2, %s18
        %p219 = scmp.lt.s32.totalorder %s218, 7
        %s220 = scalar_select %p219, %s218, 7
        %s221 = smul.addr %s220, 2
        %s222 = smul.addr %s221, 8
        %s223 = scalar_lea.vmem %s3, %s222
        %s224 = smul.u32 2, %s18
        %v226 = vld [vmem:[#allocation5] sm:$0xf]
        %v227 = vld [vmem:[#allocation5 + $0x4] sm:$0x3]
        %v228 = vld [vmem:[#allocation7] sm:$0xf]
        %v229 = vld [vmem:[#allocation7 + $0x4] sm:$0xf]
        %v230 = vld [vmem:[%s185] sm:$0xff]
        %v231 = vld [vmem:[%s185 + $0x8] sm:$0xff]
        %v232 = vld [vmem:[%s185 + $0x10] sm:$0xff]
        %v233 = vld [vmem:[%s185 + $0x18] sm:$0xff]
        %v234 = vpack.c.bf16 %v231, %v230
        %v235 = vpack.c.bf16 %v233, %v232
        %v238 = vunpack.c.l.b16 %v228
        %v239 = vunpack.c.l.b16 %v229
        %v240 = vpack.c.b16 %v239, %v238
        %vm242 = vcmask 130048
        %v244 = vsel %vm242, %v234, 0
        %v247 = vsel %vm242, %v235, 0
        %249 = vmatprep.subr.bf16.mxu0 0
        %250 = vmatpush1.bf16.msra.mxu0 %v240
        %251 = vmatprep.subr.bf16.mxu0 0
        %252 = vmatpush1.bf16.msra.mxu0 0
        %253 = vmatprep.subr.bf16.mxu0 0
        %254 = vmatpush1.bf16.msra.mxu0 0
        %255 = vmatprep.subr.bf16.mxu0 0
        %256 = vmatpush1.bf16.msra.mxu0 0
        %257 = vmatprep.subr.bf16.mxu0 0
        %258 = vmatpush1.bf16.msra.mxu0 0
        %259 = vmatprep.subr.bf16.mxu0 0
        %260 = vmatpush1.bf16.msra.mxu0 0
        %261 = vmatprep.subr.bf16.mxu0 0
        %262 = vmatpush1.bf16.msra.mxu0 0
        %263 = vmatprep.subr.bf16.mxu0 0
        %264 = vmatpush1.bf16.msra.mxu0 0
        %265 = vmatprep.subr.bf16.mxu0 0
        %266 = vmatpush1.bf16.msra.mxu0 0
        %267 = vmatprep.subr.bf16.mxu0 0
        %268 = vmatpush1.bf16.msra.mxu0 0
        %269 = vmatprep.subr.bf16.mxu0 0
        %270 = vmatpush1.bf16.msra.mxu0 0
        %271 = vmatprep.subr.bf16.mxu0 0
        %272 = vmatpush1.bf16.msra.mxu0 0
        %273 = vmatprep.subr.bf16.mxu0 0
        %274 = vmatpush1.bf16.msra.mxu0 0
        %275 = vmatprep.subr.bf16.mxu0 0
        %276 = vmatpush1.bf16.msra.mxu0 0
        %277 = vmatprep.subr.bf16.mxu0 0
        %278 = vmatpush1.bf16.msra.mxu0 0
        %279 = vmatprep.subr.bf16.mxu0 0
        %280 = vmatpush1.bf16.msra.mxu0 0
        %281 = vmatprep.mubr.bf16.mxu0 0
        %282 = vmatmul.mubr.bf16.gmra.mrb[0].mxu0 %v244
        %v283 = vpop.f32.mrb[0].mxu0
        %v284 = vadd.f32 0.0, %v283
        %v285 = vpop.f32.mrb[0].mxu0
        %v286 = vpop.f32.mrb[0].mxu0
        %v287 = vadd.f32 0.0, %v286
        %v288 = vpop.f32.mrb[0].mxu0
        %289 = vmatprep.mubr.bf16.mxu0 0
        %290 = vmatmul.mubr.bf16.gmra.mrb[0].mxu0 %v247
        %v291 = vpop.f32.mrb[0].mxu0
        %v292 = vadd.f32 0.0, %v291
        %v293 = vpop.f32.mrb[0].mxu0
        %v294 = vpop.f32.mrb[0].mxu0
        %v295 = vadd.f32 0.0, %v294
        %v296 = vpop.f32.mrb[0].mxu0
        %297 = vdwg.mxu0
        %vm298 = vcmask 89088
        %299 = vst.msk [vmem:[#allocation2] sm:$0xff] %vm298, %v284
        %300 = vst.msk [vmem:[#allocation2 + $0x8] sm:$0xff] %vm298, %v287
        %301 = vst.msk [vmem:[#allocation2 + $0x10] sm:$0xff] %vm298, %v292
        %302 = vst.msk [vmem:[#allocation2 + $0x18] sm:$0xff] %vm298, %v295
        %v303 = vld [vmem:[#allocation2] sm:$0xff]
        %v304 = vld [vmem:[#allocation2 + $0x8] sm:$0xff]
        %v305 = vpack.c.bf16 %v304, %v303
        %v308 = vunpack.c.l.b16 %v226
        %v309 = vunpack.c.l.b16 %v227
        %v310 = vpack.c.b16 %v309, %v308
        %v312 = vsel %vm242, %v310, 0
        %314 = vmatprep.subr.bf16.mxu0 0
        %315 = vmatpush1.bf16.msra.mxu0 %v305
        %316 = vmatprep.subr.bf16.mxu0 0
        %317 = vmatpush1.bf16.msra.mxu0 0
        %318 = vmatprep.subr.bf16.mxu0 0
        %319 = vmatpush1.bf16.msra.mxu0 0
        %320 = vmatprep.subr.bf16.mxu0 0
        %321 = vmatpush1.bf16.msra.mxu0 0
        %322 = vmatprep.subr.bf16.mxu0 0
        %323 = vmatpush1.bf16.msra.mxu0 0
        %324 = vmatprep.subr.bf16.mxu0 0
        %325 = vmatpush1.bf16.msra.mxu0 0
        %326 = vmatprep.subr.bf16.mxu0 0
        %327 = vmatpush1.bf16.msra.mxu0 0
        %328 = vmatprep.subr.bf16.mxu0 0
        %329 = vmatpush1.bf16.msra.mxu0 0
        %330 = vmatprep.subr.bf16.mxu0 0
        %331 = vmatpush1.bf16.msra.mxu0 0
        %332 = vmatprep.subr.bf16.mxu0 0
        %333 = vmatpush1.bf16.msra.mxu0 0
        %334 = vmatprep.subr.bf16.mxu0 0
        %335 = vmatpush1.bf16.msra.mxu0 0
        %336 = vmatprep.subr.bf16.mxu0 0
        %337 = vmatpush1.bf16.msra.mxu0 0
        %338 = vmatprep.subr.bf16.mxu0 0
        %339 = vmatpush1.bf16.msra.mxu0 0
        %340 = vmatprep.subr.bf16.mxu0 0
        %341 = vmatpush1.bf16.msra.mxu0 0
        %342 = vmatprep.subr.bf16.mxu0 0
        %343 = vmatpush1.bf16.msra.mxu0 0
        %344 = vmatprep.subr.bf16.mxu0 0
        %345 = vmatpush1.bf16.msra.mxu0 0
        %346 = vmatprep.mubr.bf16.mxu0 0
        %347 = vmatmul.mubr.bf16.gmra.mrb[0].mxu0 %v312
        %v348 = vpop.f32.mrb[0].mxu0
        %v349 = vadd.f32 0.0, %v348
        %v350 = vpop.f32.mrb[0].mxu0
        %v351 = vpop.f32.mrb[0].mxu0
        %v352 = vadd.f32 0.0, %v351
        %v353 = vpop.f32.mrb[0].mxu0
        %354 = vdwg.mxu0
        %355 = vst.msk [vmem:[%s223] sm:$0xff] %vm298, %v349
        %vm356 = vcmask 83968
        %357 = vst.msk [vmem:[%s223 + $0x8] sm:$0x7] %vm356, %v352
        %v358 = vld [vmem:[#allocation2 + $0x10] sm:$0xff]
        %v359 = vld [vmem:[#allocation2 + $0x18] sm:$0xff]
        %v360 = vpack.c.bf16 %v359, %v358
        %361 = vmatprep.subr.bf16.mxu0 0
        %362 = vmatpush1.bf16.msra.mxu0 %v360
        %363 = vmatprep.subr.bf16.mxu0 0
        %364 = vmatpush1.bf16.msra.mxu0 0
        %365 = vmatprep.subr.bf16.mxu0 0
        %366 = vmatpush1.bf16.msra.mxu0 0
        %367 = vmatprep.subr.bf16.mxu0 0
        %368 = vmatpush1.bf16.msra.mxu0 0
        %369 = vmatprep.subr.bf16.mxu0 0
        %370 = vmatpush1.bf16.msra.mxu0 0
        %371 = vmatprep.subr.bf16.mxu0 0
        %372 = vmatpush1.bf16.msra.mxu0 0
        %373 = vmatprep.subr.bf16.mxu0 0
        %374 = vmatpush1.bf16.msra.mxu0 0
        %375 = vmatprep.subr.bf16.mxu0 0
        %376 = vmatpush1.bf16.msra.mxu0 0
        %377 = vmatprep.subr.bf16.mxu0 0
        %378 = vmatpush1.bf16.msra.mxu0 0
        %379 = vmatprep.subr.bf16.mxu0 0
        %380 = vmatpush1.bf16.msra.mxu0 0
        %381 = vmatprep.subr.bf16.mxu0 0
        %382 = vmatpush1.bf16.msra.mxu0 0
        %383 = vmatprep.subr.bf16.mxu0 0
        %384 = vmatpush1.bf16.msra.mxu0 0
        %385 = vmatprep.subr.bf16.mxu0 0
        %386 = vmatpush1.bf16.msra.mxu0 0
        %387 = vmatprep.subr.bf16.mxu0 0
        %388 = vmatpush1.bf16.msra.mxu0 0
        %389 = vmatprep.subr.bf16.mxu0 0
        %390 = vmatpush1.bf16.msra.mxu0 0
        %391 = vmatprep.subr.bf16.mxu0 0
        %392 = vmatpush1.bf16.msra.mxu0 0
        %393 = vmatprep.mubr.bf16.mxu0 0
        %394 = vmatmul.mubr.bf16.gmra.mrb[0].mxu0 %v312
        %v395 = vpop.f32.mrb[0].mxu0
        %v396 = vadd.f32 0.0, %v395
        %v397 = vpop.f32.mrb[0].mxu0
        %v398 = vpop.f32.mrb[0].mxu0
        %v399 = vadd.f32 0.0, %v398
        %v400 = vpop.f32.mrb[0].mxu0
        %401 = vdwg.mxu0
        %s402 = scalar_lea.vmem %s223, 16
        %403 = vst.msk [vmem:[%s402] sm:$0xff] %vm298, %v396
        %404 = vst.msk [vmem:[%s402 + $0x8] sm:$0x7] %vm356, %v399
        %s405 = smul.u32 2, %s18
        %p406 = scmp.lt.s32.totalorder %s405, 7
        %s407 = scalar_select %p406, %s405, 7
        %s408 = smul.addr %s407, 2
        %s409 = smul.addr %s408, 8
        %s410 = scalar_lea.vmem %s3, %s409
        // Predicated region
        $region45: #{tpu_custom_call.1} parent=31 // pred_check
          %p411 = pneg %p104
        $region46: #{tpu_custom_call.1} parent=31 // pred_check_branch
          %413 = sbr.rel (%p411) target = $region48
        $region47: #{tpu_custom_call.1} parent=31 // pred_region
          %s414 = smul.u32 2, %s18
        $region48: #{tpu_custom_call.1} parent=31 // pred_fallthru
          _
      $region32: #{tpu_custom_call.1} parent=5 // pred_fallthru
        _
      %p415 = scmp.le.s32.totalorder 2, %s13
      // Predicated region
      $region49: #{tpu_custom_call.1} parent=5 // pred_check
        %p416 = pneg %p415
      $region50: #{tpu_custom_call.1} parent=5 // pred_check_branch
        %418 = sbr.rel (%p416) target = $region52
      $region51: #{tpu_custom_call.1} parent=5 // pred_region
        %s419 = ssub.s32 %s13, 2
        // Predicated region
        $region53: #{tpu_custom_call.1} parent=51 // pred_check
          %p420 = pneg %p110
        $region54: #{tpu_custom_call.1} parent=51 // pred_check_branch
          %422 = sbr.rel (%p420) target = $region56
        $region55: #{tpu_custom_call.1} parent=51 // pred_region
          %s423 = smul.u32 2, %s19
          %p424 = scmp.lt.s32.totalorder %s423, 7
          %s425 = scalar_select %p424, %s423, 7
          %s426 = smul.addr %s425, 2
          %s427 = smul.addr %s426, 8
          %s428 = scalar_lea.vmem %s3, %s427
        $region56: #{tpu_custom_call.1} parent=51 // pred_fallthru
          _
      $region52: #{tpu_custom_call.1} parent=5 // pred_fallthru
        _
    $region6: #{tpu_custom_call.1} parent=1 // loop_footer
      %s17 = sadd.s32 1, %s13
    $region7: #{tpu_custom_call.1} parent=1 // loop_footer_branch
      %12 = sbr.rel target = $region3
    $region8: #{tpu_custom_call.1} parent=1 // loop_exit
      _
    %429 = vsyncpa [#allocation4], 1
    %s430 = scalar_lea.sflag [#allocation4], 1
    %431 = vsyncpa %s430, 1
    %432 = vsyncpa [#allocation6], 1

</llo_original>
